<compile_context>
chip_gen: v5e
topology: v5e:2x2
jax: 0.10.0
libtpu: 0.0.40
codegen_flags: <defaults>
</compile_context>

<pallas_src>
import functools

import jax
import jax.numpy as jnp
from jax import lax
from jax.experimental import pallas as pl
from jax.experimental.pallas import tpu as pltpu


def _vmem_limit_bytes():
    try:
        cap = pltpu.get_tpu_info().vmem_capacity_bytes
        return int(min(100 * 1024 * 1024, cap * 3 // 4))
    except Exception:
        return 48 * 1024 * 1024   # safe on v5e / v6e / v7x


_VMEM_LIMIT = _vmem_limit_bytes()


def _pick_tile(n, max_tile, align):
    """Largest tile <= max_tile dividing n and `align`-aligned; else full n."""
    if n <= max_tile:
        return n
    for t in range(max_tile, align - 1, -1):
        if n % t == 0 and t % align == 0:
            return t
    return n


def _pick_time_chunk(t_len, max_chunk=16):
    for t in range(min(t_len, max_chunk), 0, -1):
        if t_len % t == 0:
            return t
    return t_len


# ----------------------------------------------------------------------------
# Time-parallel input projection: gates_x = x @ W_ih^T + (b_ih + b_hh).
# x arrives already in bf16 (embedding output / previous layer's bf16 h).
# ----------------------------------------------------------------------------
def _gates_x_kernel(x_ref, w_ref, b_ref, out_ref):
    out_ref[...] = (
        jnp.dot(x_ref[...], w_ref[...], preferred_element_type=jnp.float32)
        + b_ref[...])


def input_projection(x_flat_bf16, w_ih_t_bf16, bias_f32):
    """x: (N, I) bf16; w: (I, 4H) bf16; bias: (1, 4H) f32 -> (N, 4H) f32."""
    N, I = x_flat_bf16.shape
    G = w_ih_t_bf16.shape[1]
    n_tile = _pick_tile(N, 512, 8)

    return pl.pallas_call(
        _gates_x_kernel,
        out_shape=jax.ShapeDtypeStruct((N, G), jnp.float32),
        grid_spec=pltpu.PrefetchScalarGridSpec(
            num_scalar_prefetch=0,
            grid=(N // n_tile,),
            in_specs=[
                pl.BlockSpec((n_tile, I), lambda i: (i, 0)),
                pl.BlockSpec((I, G), lambda i: (0, 0)),
                pl.BlockSpec((1, G), lambda i: (0, 0)),
            ],
            out_specs=pl.BlockSpec((n_tile, G), lambda i: (i, 0)),
        ),
        compiler_params=pltpu.CompilerParams(
            dimension_semantics=("parallel",),
            vmem_limit_bytes=_VMEM_LIMIT),
    )(x_flat_bf16, w_ih_t_bf16, bias_f32)


# ----------------------------------------------------------------------------
# Recurrent LSTM kernel, time-chunked: grid = (batch_tiles, T // Tc).
# Each grid step processes Tc timesteps in an unrolled in-kernel loop; h (bf16)
# and c (f32) are carried in VMEM scratch across the serial time axis.
# Gate order matches PyTorch nn.LSTM: [i | f | g | o].
# ----------------------------------------------------------------------------
def _lstm_recurrent_kernel(hidden_size, t_chunk,
                           gx_ref, whh_ref, out_ref, h_sc, c_sc):
    tc_idx = pl.program_id(1)

    @pl.when(tc_idx == 0)
    def _():
        h_sc[...] = jnp.zeros_like(h_sc)
        c_sc[...] = jnp.zeros_like(c_sc)

    H = hidden_size
    whh = whh_ref[...]                                   # (H, 4H) bf16

    def step(tau, carry):
        h_bf, c = carry                                  # (Bt,H) bf16 / f32
        gates = gx_ref[tau] + jnp.dot(h_bf, whh,
                                      preferred_element_type=jnp.float32)
        i_g = jax.nn.sigmoid(gates[:, 0 * H:1 * H])
        f_g = jax.nn.sigmoid(gates[:, 1 * H:2 * H])
        g_g = jnp.tanh(gates[:, 2 * H:3 * H])
        o_g = jax.nn.sigmoid(gates[:, 3 * H:4 * H])
        c_new = f_g * c + i_g * g_g
        h_new = o_g * jnp.tanh(c_new)
        h_new_bf = h_new.astype(jnp.bfloat16)
        out_ref[tau] = h_new_bf
        return h_new_bf, c_new

    h_fin, c_fin = lax.fori_loop(0, t_chunk, step,
                                 (h_sc[...], c_sc[...]), unroll=True)
    h_sc[...] = h_fin
    c_sc[...] = c_fin


def lstm_layer(x_bf16, w_ih, w_hh, b_ih, b_hh):
    """x: (T, B, I) bf16; torch-layout weights. -> (T, B, H) bf16."""
    T, B, I = x_bf16.shape
    H = w_hh.shape[1]
    G = 4 * H

    w_ih_t = jnp.asarray(w_ih.T, jnp.bfloat16)               # (I, 4H)
    w_hh_t = jnp.asarray(w_hh.T, jnp.bfloat16)               # (H, 4H)
    bias = jnp.asarray((b_ih + b_hh).reshape(1, G), jnp.float32)

    # (1) Hoisted, time-parallel input projection (f32 gates).
    gates_x = input_projection(x_bf16.reshape(T * B, I), w_ih_t, bias)
    gates_x = gates_x.reshape(T, B, G)

    # (2) Sequential recurrence, time-chunked.  Single batch tile: splitting
    # only helps when a second TensorCore exists AND B >= 16.
    # TODO(synk): split the batch across v7x's two TensorCores when B >= 16.
    # TODO(synk): tile the 4H gate axis of W_hh for H >= 1536 (v7x VMEM budget).
    b_tile = B
    t_chunk = _pick_time_chunk(T, 16)
    grid = (B // b_tile, T // t_chunk)

    kernel = functools.partial(_lstm_recurrent_kernel, H, t_chunk)
    return pl.pallas_call(
        kernel,
        out_shape=jax.ShapeDtypeStruct((T, B, H), jnp.bfloat16),
        grid_spec=pltpu.PrefetchScalarGridSpec(
            num_scalar_prefetch=0,
            grid=grid,
            in_specs=[
                pl.BlockSpec((t_chunk, b_tile, G), lambda b, t: (t, b, 0)),
                pl.BlockSpec((H, G), lambda b, t: (0, 0)),   # resident weight
            ],
            out_specs=pl.BlockSpec((t_chunk, b_tile, H), lambda b, t: (t, b, 0)),
            scratch_shapes=[
                pltpu.VMEM((b_tile, H), jnp.bfloat16),   # h (bf16, feeds MXU)
                pltpu.VMEM((b_tile, H), jnp.float32),    # c (f32)
            ],
        ),
        compiler_params=pltpu.CompilerParams(
            dimension_semantics=("parallel", "arbitrary"),
            vmem_limit_bytes=_VMEM_LIMIT),
    )(gates_x, w_hh_t)


# ----------------------------------------------------------------------------
# Output projection + LogSoftmax in a SINGLE pass.
# grid = (row tiles, vocab tiles); the (n_tile, V) output row-block is resident
# in VMEM across the vocab axis (output index constant in j).  Each j writes
# its logits tile into the resident block and updates an online logsumexp; the
# last j subtracts lse in place.  One HBM write of N*V, no logits round trip.
# ----------------------------------------------------------------------------
def _proj_logsoftmax_kernel(v_tile, h_ref, w_ref, b_ref, out_ref, m_sc, l_sc):
    j = pl.program_id(1)

    @pl.when(j == 0)
    def _():
        m_sc[...] = jnp.full_like(m_sc, -jnp.inf)
        l_sc[...] = jnp.zeros_like(l_sc)

    logits = (jnp.dot(h_ref[...], w_ref[...],
                      preferred_element_type=jnp.float32)
              + b_ref[...])                                   # (rows, v_tile)

    col = pl.multiple_of(j * v_tile, 128)
    out_ref[:, pl.ds(col, v_tile)] = logits

    m_prev = m_sc[...]
    m_new = jnp.maximum(m_prev, jnp.max(logits, axis=-1, keepdims=True))
    l_sc[...] = (l_sc[...] * jnp.exp(m_prev - m_new)
                 + jnp.sum(jnp.exp(logits - m_new), axis=-1, keepdims=True))
    m_sc[...] = m_new

    @pl.when(j == pl.num_programs(1) - 1)
    def _():
        lse = m_sc[...] + jnp.log(l_sc[...])
        out_ref[...] = out_ref[...] - lse


def proj_logsoftmax(h_flat_bf16, w_out, b_out):
    """h: (N, H) bf16; w_out: (V, H) torch layout; b_out: (V,). -> (N, V) f32."""
    N, H = h_flat_bf16.shape
    V = w_out.shape[0]
    w_t = jnp.asarray(w_out.T, jnp.bfloat16)                  # (H, V)
    b = jnp.asarray(b_out.reshape(1, V), jnp.float32)

    # Resident (n_tile, V) f32 out block is double-buffered: keep it within a
    # quarter of the VMEM budget.
    max_rows = max(8, ((_VMEM_LIMIT // 4) // (V * 4 * 2)) // 8 * 8)
    n_tile = _pick_tile(N, min(512, max_rows), 8)
    v_tile = _pick_tile(V, 2048, 128)
    grid = (N // n_tile, V // v_tile)

    kernel = functools.partial(_proj_logsoftmax_kernel, v_tile)
    return pl.pallas_call(
        kernel,
        out_shape=jax.ShapeDtypeStruct((N, V), jnp.float32),
        grid_spec=pltpu.PrefetchScalarGridSpec(
            num_scalar_prefetch=0,
            grid=grid,
            in_specs=[
                pl.BlockSpec((n_tile, H), lambda i, j: (i, 0)),
                pl.BlockSpec((H, v_tile), lambda i, j: (0, j)),
                pl.BlockSpec((1, v_tile), lambda i, j: (0, j)),
            ],
            # Output block constant in j -> resident accumulator, one writeback.
            out_specs=pl.BlockSpec((n_tile, V), lambda i, j: (i, 0)),
            scratch_shapes=[pltpu.VMEM((n_tile, 1), jnp.float32),   # running max
                            pltpu.VMEM((n_tile, 1), jnp.float32)],  # running sum
        ),
        compiler_params=pltpu.CompilerParams(
            dimension_semantics=("parallel", "arbitrary"),
            vmem_limit_bytes=_VMEM_LIMIT),
    )(h_flat_bf16, w_t, b)


# ----------------------------------------------------------------------------
# Full LM forward (glue in plain JAX, hot paths in Pallas).
# ----------------------------------------------------------------------------
def lm_forward(params, input_ids):
    """input_ids: (T, B) int32 -> (T, B, V) log-probs."""
    T, B = input_ids.shape

    # Embedding lookup (gather -- glue op); activations carried as bf16 since
    # every consumer is a bf16 MXU matmul.
    embedded = jnp.take(params["embedding"], input_ids, axis=0)   # (T, B, I)
    x = embedded.astype(jnp.bfloat16)
    # Dropout(p=0.2): identity in eval mode.
    # TODO(synk): train-mode dropout mask (pltpu.stateful_bernoulli) not emitted.

    for layer in params["lstm"]:
        x = lstm_layer(x, layer["w_ih"], layer["w_hh"],
                       layer["b_ih"], layer["b_hh"])              # (T, B, H) bf16

    H = x.shape[-1]
    V = params["out_w"].shape[0]
    log_probs = proj_logsoftmax(x.reshape(T * B, H),
                                params["out_w"], params["out_b"])
    return log_probs.reshape(T, B, V)


def lm_forward_ref(params, input_ids):
    """Pure-JAX reference mirroring the kernel's bf16-matmul / f32-accum math."""
    def bdot(a, b):
        return jnp.dot(a.astype(jnp.bfloat16), b.astype(jnp.bfloat16),
                       preferred_element_type=jnp.float32)

    T, B = input_ids.shape
    x = jnp.take(params["embedding"], input_ids, axis=0)
    for layer in params["lstm"]:
        H = layer["w_hh"].shape[1]
        wih_t, whh_t = layer["w_ih"].T, layer["w_hh"].T
        bias = (layer["b_ih"] + layer["b_hh"]).reshape(1, -1)
        h = jnp.zeros((B, H), jnp.float32)
        c = jnp.zeros((B, H), jnp.float32)
        outs = []
        for t in range(T):
            gates = bdot(x[t], wih_t) + bias + bdot(h, whh_t)
            i_g = jax.nn.sigmoid(gates[:, 0 * H:1 * H])
            f_g = jax.nn.sigmoid(gates[:, 1 * H:2 * H])
            g_g = jnp.tanh(gates[:, 2 * H:3 * H])
            o_g = jax.nn.sigmoid(gates[:, 3 * H:4 * H])
            c = f_g * c + i_g * g_g
            h = o_g * jnp.tanh(c)
            outs.append(h)
        x = jnp.stack(outs, axis=0)
    logits = bdot(x.reshape(T * B, -1), params["out_w"].T) + params["out_b"][None, :]
    return jax.nn.log_softmax(logits, axis=-1).reshape(T, B, -1)


def init_params(key, token_size, input_size, hidden_size, layer_size):
    keys = jax.random.split(key, 3 + 4 * layer_size)
    k_emb, k_ow, k_ob = keys[0], keys[1], keys[2]
    params = {
        "embedding": jax.random.normal(k_emb, (token_size, input_size),
                                       jnp.float32),
        "out_w": 0.1 * jax.random.normal(k_ow, (token_size, hidden_size),
                                         jnp.float32),
        "out_b": 0.1 * jax.random.normal(k_ob, (token_size,), jnp.float32),
        "lstm": [],
    }
    for l in range(layer_size):
        in_sz = input_size if l == 0 else hidden_size
        kw_ih, kw_hh, kb_ih, kb_hh = keys[3 + 4 * l: 3 + 4 * (l + 1)]
        params["lstm"].append({
            "w_ih": 0.1 * jax.random.normal(kw_ih, (4 * hidden_size, in_sz),
                                            jnp.float32),
            "w_hh": 0.1 * jax.random.normal(kw_hh, (4 * hidden_size, hidden_size),
                                            jnp.float32),
            "b_ih": 0.1 * jax.random.normal(kb_ih, (4 * hidden_size,),
                                            jnp.float32),
            "b_hh": 0.1 * jax.random.normal(kb_hh, (4 * hidden_size,),
                                            jnp.float32),
        })
    return params


if __name__ == "__main__":
    # Small but hardware-aligned demo shapes: B multiple of 8 (sublanes),
    # input/hidden multiples of 128 (lanes), vocab = 4096 so the log-softmax
    # exercises two vocab tiles (online logsumexp + resident-row subtraction).
    token_size, input_size, hidden_size, layer_size = 4096, 128, 128, 2
    T, B = 8, 8

    key = jax.random.PRNGKey(0)
    k_params, k_ids = jax.random.split(key)
    params = init_params(k_params, token_size, input_size, hidden_size,
                         layer_size)
    input_ids = jax.random.randint(k_ids, (T, B), 0, token_size, jnp.int32)

    out = lm_forward(params, input_ids)
    jax.block_until_ready(out)

    assert out.shape == (T, B, token_size)
    # log-softmax rows should sum to ~1 in probability space.
    row_sums = jnp.exp(out).sum(axis=-1)
    assert bool(jnp.allclose(row_sums, 1.0, atol=1e-3))
    # Cross-check against a pure-JAX reference using the same bf16-matmul math.
    ref = lm_forward_ref(params, input_ids)
    assert bool(jnp.allclose(out, ref, atol=2e-2, rtol=2e-2))
    print("KERNEL_OK")
</pallas_src>

<mosaic_0001>
module attributes {stable_mosaic.version = 11 : i64} {
  func.func @_gates_x_kernel(%arg0: i32, %arg1: memref<64x128xbf16, #tpu.memory_space<vmem>>, %arg2: memref<128x512xbf16, #tpu.memory_space<vmem>>, %arg3: memref<1x512xf32, #tpu.memory_space<vmem>>, %arg4: memref<64x512xf32, #tpu.memory_space<vmem>>) attributes {dimension_semantics = [#tpu.dimension_semantics<parallel>], iteration_bounds = array<i64: 1>, scalar_prefetch = 0 : i64, scratch_operands = 0 : i64, tpu.core_type = #tpu.core_type<tc>, window_params = [{transform_indices = @transform_0, window_bounds = array<i64: 64, 128>}, {pipeline_mode = #tpu.pipeline_mode<synchronous>, transform_indices = @transform_1, window_bounds = array<i64: 128, 512>}, {pipeline_mode = #tpu.pipeline_mode<synchronous>, transform_indices = @transform_2, window_bounds = array<i64: 1, 512>}, {transform_indices = @transform_3, window_bounds = array<i64: 64, 512>}]} {
    %c0 = arith.constant 0 : index
    %c0_0 = arith.constant 0 : index
    %0 = vector.load %arg1[%c0, %c0_0] : memref<64x128xbf16, #tpu.memory_space<vmem>>, vector<64x128xbf16>
    %c0_1 = arith.constant 0 : index
    %c0_2 = arith.constant 0 : index
    %1 = vector.load %arg2[%c0_1, %c0_2] : memref<128x512xbf16, #tpu.memory_space<vmem>>, vector<128x512xbf16>
    %cst = arith.constant dense<0.000000e+00> : vector<64x512xf32>
    %2 = tpu.matmul %0, %1, %cst {dimension_numbers = #tpu.dot_dimension_numbers<[1], [0], [0], [1], [0, 0, 1, 1], [], []>} : vector<64x128xbf16>, vector<128x512xbf16>, vector<64x512xf32> -> vector<64x512xf32>
    %c0_3 = arith.constant 0 : index
    %c0_4 = arith.constant 0 : index
    %3 = vector.load %arg3[%c0_3, %c0_4] : memref<1x512xf32, #tpu.memory_space<vmem>>, vector<1x512xf32>
    %4 = vector.broadcast %3 : vector<1x512xf32> to vector<64x512xf32>
    %5 = arith.addf %2, %4 : vector<64x512xf32>
    %c0_5 = arith.constant 0 : index
    %c0_6 = arith.constant 0 : index
    %6 = vector.load %arg4[%c0_5, %c0_6] : memref<64x512xf32, #tpu.memory_space<vmem>>, vector<64x512xf32>
    tpu.vector_store %arg4[%c0_5, %c0_6], %5 {strides = array<i32>} : memref<64x512xf32, #tpu.memory_space<vmem>>, vector<64x512xf32>,
    return
  }
  func.func @transform_0(%arg0: i32) -> (i32, i32) {
    %c0_i32 = arith.constant 0 : i32
    %c0_i32_0 = arith.constant 0 : i32
    return %arg0, %c0_i32 : i32, i32
  }
  func.func @transform_1(%arg0: i32) -> (i32, i32) {
    %c0_i32 = arith.constant 0 : i32
    %c0_i32_0 = arith.constant 0 : i32
    %c0_i32_1 = arith.constant 0 : i32
    return %c0_i32, %c0_i32_0 : i32, i32
  }
  func.func @transform_2(%arg0: i32) -> (i32, i32) {
    %c0_i32 = arith.constant 0 : i32
    %c0_i32_0 = arith.constant 0 : i32
    %c0_i32_1 = arith.constant 0 : i32
    return %c0_i32, %c0_i32_0 : i32, i32
  }
  func.func @transform_3(%arg0: i32) -> (i32, i32) {
    %c0_i32 = arith.constant 0 : i32
    %c0_i32_0 = arith.constant 0 : i32
    return %arg0, %c0_i32 : i32, i32
  }
}

</mosaic_0001>

<llo_original>
// kernel: tpu_custom_call.1
$region0: #{tpu_custom_call.1}
  #allocation0 [shape = 'u32[]', space=smem, size = 0x4, offset = 0x4, fixed_abs, tag = 'smem constant byte address 0x4 - core index']
  #allocation1 [shape = 'u32[72,128]{1,0:T(1,128)}', space=vmem, size = 0x9000, scoped, tag = 'internal scratch']
  %s0 = inlined_call_operand.hbm [shape: bf16[64,128], index: 0, kind: input, shape index: {}]
  %s1 = inlined_call_operand.hbm [shape: bf16[128,512], index: 1, kind: input, shape index: {}]
  %s2 = inlined_call_operand.hbm [shape: f32[1,512], index: 2, kind: input, shape index: {}]
  %s3 = inlined_call_operand.hbm [shape: f32[64,512], index: 3, kind: output, shape index: {}]
  %s4 = sld [smem:[#allocation0]]
  $region34: #{tpu_custom_call.1} parent=0
    _
  %s6 = ssub.s32 1, %s4
  %s7 = scalar_select 0, %s6, %s4
  $region1: #{tpu_custom_call.1} parent=0
    #allocation2 [shape = 'u8[16384]{0}', space=vmem, size = 0x4000, scoped, tag = 'input window, operand 0, single buffered']
    #allocation3 [shape = 's32[1]{0}', space=sflag, size = 0x4, scoped, tag = 'scoped memory for tpu_custom_call.1']
    #allocation4 [shape = 's32[1]{0}', space=sflag, size = 0x4, scoped, tag = 'scoped memory for tpu_custom_call.1']
    #allocation5 [shape = 'u8[131072]{0}', space=vmem, size = 0x20000, scoped, tag = 'input window, operand 1, single buffered']
    #allocation6 [shape = 's32[1]{0}', space=sflag, size = 0x4, scoped, tag = 'scoped memory for tpu_custom_call.1']
    #allocation7 [shape = 'u8[2048]{0}', space=vmem, size = 0x800, scoped, tag = 'input window, operand 2, single buffered']
    #allocation8 [shape = 'u8[131072]{0}', space=vmem, size = 0x20000, scoped, tag = 'output window, operand 0, single buffered']
    %8 = vsyncpa [#allocation3], 0
    %9 = vsyncpa [#allocation6], 0
    %10 = vsyncpa [#allocation4], 0
    // Predicated region
    $region2: #{tpu_custom_call.1} parent=1 // pred_check
      _
    $region3: #{tpu_custom_call.1} parent=1 // pred_check_branch
      %12 = sbr.rel (0) target = $region5
    $region4: #{tpu_custom_call.1} parent=1 // pred_region
      %14 = vsyncadd [#allocation3], 0
      %s15 = sshll.u32 %s0, 4
      %s16 = int_to_ptr.hbm [resolvable:$true] %s15
      %s17 = sshll.u32 [#allocation2], 4
      %s18 = int_to_ptr.vmem [resolvable:$true] %s17
      %23 = dma.hbm_to_vmem [thread:$0]  %s16, 512, %s18, [#allocation3], 64, 64, 4
    $region5: #{tpu_custom_call.1} parent=1 // pred_fallthru
      _
    // Predicated region
    $region6: #{tpu_custom_call.1} parent=1 // pred_check
      _
    $region7: #{tpu_custom_call.1} parent=1 // pred_check_branch
      %25 = sbr.rel (0) target = $region9
    $region8: #{tpu_custom_call.1} parent=1 // pred_region
      %27 = vsyncadd [#allocation6], 0
      %s28 = sshll.u32 %s1, 4
      %s29 = int_to_ptr.hbm [resolvable:$true] %s28
      %s30 = sshll.u32 [#allocation5], 4
      %s31 = int_to_ptr.vmem [resolvable:$true] %s30
      %36 = dma.hbm_to_vmem [thread:$0]  %s29, 4096, %s31, [#allocation6], 256, 256, 16
    $region9: #{tpu_custom_call.1} parent=1 // pred_fallthru
      _
    // Predicated region
    $region10: #{tpu_custom_call.1} parent=1 // pred_check
      _
    $region11: #{tpu_custom_call.1} parent=1 // pred_check_branch
      %38 = sbr.rel (0) target = $region13
    $region12: #{tpu_custom_call.1} parent=1 // pred_region
      %40 = vsyncadd [#allocation6], 0
      %s42 = sshll.u32 %s2, 4
      %s43 = int_to_ptr.hbm [resolvable:$true] %s42
      %s44 = sshll.u32 [#allocation7], 4
      %s45 = int_to_ptr.vmem [resolvable:$true] %s44
      %47 = dma.hbm_to_vmem [thread:$0]  %s43, 64, %s45, [#allocation6]
    $region13: #{tpu_custom_call.1} parent=1 // pred_fallthru
      _
    // Predicated region
    $region14: #{tpu_custom_call.1} parent=1 // pred_check
      _
    $region15: #{tpu_custom_call.1} parent=1 // pred_check_branch
      %49 = sbr.rel (0) target = $region17
    $region16: #{tpu_custom_call.1} parent=1 // pred_region
      %51 = dma.done [#allocation3], 512
    $region17: #{tpu_custom_call.1} parent=1 // pred_fallthru
      _
    // Predicated region
    $region18: #{tpu_custom_call.1} parent=1 // pred_check
      _
    $region19: #{tpu_custom_call.1} parent=1 // pred_check_branch
      %53 = sbr.rel (0) target = $region21
    $region20: #{tpu_custom_call.1} parent=1 // pred_region
      %55 = dma.done [#allocation6], 4096
    $region21: #{tpu_custom_call.1} parent=1 // pred_fallthru
      _
    // Predicated region
    $region22: #{tpu_custom_call.1} parent=1 // pred_check
      _
    $region23: #{tpu_custom_call.1} parent=1 // pred_check_branch
      %57 = sbr.rel (0) target = $region25
    $region24: #{tpu_custom_call.1} parent=1 // pred_region
      %59 = dma.done [#allocation6], 64
    $region25: #{tpu_custom_call.1} parent=1 // pred_fallthru
      _
    %v60 = vld [vmem:[#allocation2] sm:$0xf]
    %v61 = vld [vmem:[#allocation2 + $0x4] sm:$0xf]
    %v62 = vld [vmem:[#allocation2 + $0x8] sm:$0xf]
    %v63 = vld [vmem:[#allocation2 + $0xc] sm:$0xf]
    %v64 = vld [vmem:[#allocation2 + $0x10] sm:$0xf]
    %v65 = vld [vmem:[#allocation2 + $0x14] sm:$0xf]
    %v66 = vld [vmem:[#allocation2 + $0x18] sm:$0xf]
    %v67 = vld [vmem:[#allocation2 + $0x1c] sm:$0xf]
    %v68 = vld [vmem:[#allocation5] sm:$0xff]
    %v69 = vld [vmem:[#allocation5 + $0x8] sm:$0xff]
    %v70 = vld [vmem:[#allocation5 + $0x10] sm:$0xff]
    %v71 = vld [vmem:[#allocation5 + $0x18] sm:$0xff]
    %v72 = vld [vmem:[#allocation5 + $0x20] sm:$0xff]
    %v73 = vld [vmem:[#allocation5 + $0x28] sm:$0xff]
    %v74 = vld [vmem:[#allocation5 + $0x30] sm:$0xff]
    %v75 = vld [vmem:[#allocation5 + $0x38] sm:$0xff]
    %v76 = vld [vmem:[#allocation5 + $0x40] sm:$0xff]
    %v77 = vld [vmem:[#allocation5 + $0x48] sm:$0xff]
    %v78 = vld [vmem:[#allocation5 + $0x50] sm:$0xff]
    %v79 = vld [vmem:[#allocation5 + $0x58] sm:$0xff]
    %v80 = vld [vmem:[#allocation5 + $0x60] sm:$0xff]
    %v81 = vld [vmem:[#allocation5 + $0x68] sm:$0xff]
    %v82 = vld [vmem:[#allocation5 + $0x70] sm:$0xff]
    %v83 = vld [vmem:[#allocation5 + $0x78] sm:$0xff]
    %v84 = vld [vmem:[#allocation5 + $0x80] sm:$0xff]
    %v85 = vld [vmem:[#allocation5 + $0x88] sm:$0xff]
    %v86 = vld [vmem:[#allocation5 + $0x90] sm:$0xff]
    %v87 = vld [vmem:[#allocation5 + $0x98] sm:$0xff]
    %v88 = vld [vmem:[#allocation5 + $0xa0] sm:$0xff]
    %v89 = vld [vmem:[#allocation5 + $0xa8] sm:$0xff]
    %v90 = vld [vmem:[#allocation5 + $0xb0] sm:$0xff]
    %v91 = vld [vmem:[#allocation5 + $0xb8] sm:$0xff]
    %v92 = vld [vmem:[#allocation5 + $0xc0] sm:$0xff]
    %v93 = vld [vmem:[#allocation5 + $0xc8] sm:$0xff]
    %v94 = vld [vmem:[#allocation5 + $0xd0] sm:$0xff]
    %v95 = vld [vmem:[#allocation5 + $0xd8] sm:$0xff]
    %v96 = vld [vmem:[#allocation5 + $0xe0] sm:$0xff]
    %v97 = vld [vmem:[#allocation5 + $0xe8] sm:$0xff]
    %v98 = vld [vmem:[#allocation5 + $0xf0] sm:$0xff]
    %v99 = vld [vmem:[#allocation5 + $0xf8] sm:$0xff]
    %v100 = vld [vmem:[#allocation7] sm:$0xf]
    %v102 = vperm.slane %v100, 0
    %v103 = vperm.slane %v100, 1
    %v104 = vperm.slane %v100, 2
    %v105 = vperm.slane %v100, 3
    %v118 = vunpack.c.l.b16 %v60
    %v119 = vunpack.c.l.b16 %v61
    %v120 = vunpack.c.l.b16 %v62
    %v121 = vunpack.c.l.b16 %v63
    %v122 = vunpack.c.l.b16 %v64
    %v123 = vunpack.c.l.b16 %v65
    %v124 = vunpack.c.l.b16 %v66
    %v125 = vunpack.c.l.b16 %v67
    %v126 = vpack.c.b16 %v119, %v118
    %v127 = vpack.c.b16 %v121, %v120
    %v128 = vpack.c.b16 %v123, %v122
    %v129 = vpack.c.b16 %v125, %v124
    %v166 = vunpack.c.l.b16 %v68
    %v167 = vunpack.c.h.b16 %v68
    %v168 = vunpack.c.l.b16 %v69
    %v169 = vunpack.c.h.b16 %v69
    %v170 = vunpack.c.l.b16 %v70
    %v171 = vunpack.c.h.b16 %v70
    %v172 = vunpack.c.l.b16 %v71
    %v173 = vunpack.c.h.b16 %v71
    %v174 = vunpack.c.l.b16 %v72
    %v175 = vunpack.c.h.b16 %v72
    %v176 = vunpack.c.l.b16 %v73
    %v177 = vunpack.c.h.b16 %v73
    %v178 = vunpack.c.l.b16 %v74
    %v179 = vunpack.c.h.b16 %v74
    %v180 = vunpack.c.l.b16 %v75
    %v181 = vunpack.c.h.b16 %v75
    %v182 = vunpack.c.l.b16 %v76
    %v183 = vunpack.c.h.b16 %v76
    %v184 = vunpack.c.l.b16 %v77
    %v185 = vunpack.c.h.b16 %v77
    %v186 = vunpack.c.l.b16 %v78
    %v187 = vunpack.c.h.b16 %v78
    %v188 = vunpack.c.l.b16 %v79
    %v189 = vunpack.c.h.b16 %v79
    %v190 = vunpack.c.l.b16 %v80
    %v191 = vunpack.c.h.b16 %v80
    %v192 = vunpack.c.l.b16 %v81
    %v193 = vunpack.c.h.b16 %v81
    %v194 = vunpack.c.l.b16 %v82
    %v195 = vunpack.c.h.b16 %v82
    %v196 = vunpack.c.l.b16 %v83
    %v197 = vunpack.c.h.b16 %v83
    %v198 = vunpack.c.l.b16 %v84
    %v199 = vunpack.c.h.b16 %v84
    %v200 = vunpack.c.l.b16 %v85
    %v201 = vunpack.c.h.b16 %v85
    %v202 = vunpack.c.l.b16 %v86
    %v203 = vunpack.c.h.b16 %v86
    %v204 = vunpack.c.l.b16 %v87
    %v205 = vunpack.c.h.b16 %v87
    %v206 = vunpack.c.l.b16 %v88
    %v207 = vunpack.c.h.b16 %v88
    %v208 = vunpack.c.l.b16 %v89
    %v209 = vunpack.c.h.b16 %v89
    %v210 = vunpack.c.l.b16 %v90
    %v211 = vunpack.c.h.b16 %v90
    %v212 = vunpack.c.l.b16 %v91
    %v213 = vunpack.c.h.b16 %v91
    %v214 = vunpack.c.l.b16 %v92
    %v215 = vunpack.c.h.b16 %v92
    %v216 = vunpack.c.l.b16 %v93
    %v217 = vunpack.c.h.b16 %v93
    %v218 = vunpack.c.l.b16 %v94
    %v219 = vunpack.c.h.b16 %v94
    %v220 = vunpack.c.l.b16 %v95
    %v221 = vunpack.c.h.b16 %v95
    %v222 = vunpack.c.l.b16 %v96
    %v223 = vunpack.c.h.b16 %v96
    %v224 = vunpack.c.l.b16 %v97
    %v225 = vunpack.c.h.b16 %v97
    %v226 = vunpack.c.l.b16 %v98
    %v227 = vunpack.c.h.b16 %v98
    %v228 = vunpack.c.l.b16 %v99
    %v229 = vunpack.c.h.b16 %v99
    %v230 = vpack.c.b16 %v170, %v166
    %v231 = vpack.c.b16 %v171, %v167
    %v232 = vpack.c.b16 %v172, %v168
    %v233 = vpack.c.b16 %v173, %v169
    %v234 = vpack.c.b16 %v178, %v174
    %v235 = vpack.c.b16 %v179, %v175
    %v236 = vpack.c.b16 %v180, %v176
    %v237 = vpack.c.b16 %v181, %v177
    %v238 = vpack.c.b16 %v186, %v182
    %v239 = vpack.c.b16 %v187, %v183
    %v240 = vpack.c.b16 %v188, %v184
    %v241 = vpack.c.b16 %v189, %v185
    %v242 = vpack.c.b16 %v194, %v190
    %v243 = vpack.c.b16 %v195, %v191
    %v244 = vpack.c.b16 %v196, %v192
    %v245 = vpack.c.b16 %v197, %v193
    %v246 = vpack.c.b16 %v202, %v198
    %v247 = vpack.c.b16 %v203, %v199
    %v248 = vpack.c.b16 %v204, %v200
    %v249 = vpack.c.b16 %v205, %v201
    %v250 = vpack.c.b16 %v210, %v206
    %v251 = vpack.c.b16 %v211, %v207
    %v252 = vpack.c.b16 %v212, %v208
    %v253 = vpack.c.b16 %v213, %v209
    %v254 = vpack.c.b16 %v218, %v214
    %v255 = vpack.c.b16 %v219, %v215
    %v256 = vpack.c.b16 %v220, %v216
    %v257 = vpack.c.b16 %v221, %v217
    %v258 = vpack.c.b16 %v226, %v222
    %v259 = vpack.c.b16 %v227, %v223
    %v260 = vpack.c.b16 %v228, %v224
    %v261 = vpack.c.b16 %v229, %v225
    %294 = vmatpush.bf16.msra.mxu0 %v258
    %295 = vmatpush.bf16.msra.mxu0 %v254
    %296 = vmatpush.bf16.msra.mxu0 %v250
    %297 = vmatpush.bf16.msra.mxu0 %v246
    %298 = vmatpush.bf16.msra.mxu0 %v242
    %299 = vmatpush.bf16.msra.mxu0 %v238
    %300 = vmatpush.bf16.msra.mxu0 %v234
    %301 = vmatpush.bf16.msra.mxu0 %v230
    %302 = vmatmul.bf16.gmra.mxu0 %v126
    %v303 = vpop.f32.mrf.mxu0
    %v304 = vadd.f32 %v102, %v303
    %v305 = vpop.f32.mrf.mxu0
    %v306 = vadd.f32 %v102, %v305
    %307 = vmatmul.bf16.gmra.mxu0 %v127
    %v308 = vpop.f32.mrf.mxu0
    %v309 = vadd.f32 %v102, %v308
    %v310 = vpop.f32.mrf.mxu0
    %v311 = vadd.f32 %v102, %v310
    %312 = vmatmul.bf16.gmra.mxu0 %v128
    %v313 = vpop.f32.mrf.mxu0
    %v314 = vadd.f32 %v102, %v313
    %v315 = vpop.f32.mrf.mxu0
    %v316 = vadd.f32 %v102, %v315
    %317 = vmatmul.bf16.gmra.mxu0 %v129
    %v318 = vpop.f32.mrf.mxu0
    %v319 = vadd.f32 %v102, %v318
    %v320 = vpop.f32.mrf.mxu0
    %v321 = vadd.f32 %v102, %v320
    %322 = vdwg.mxu0
    %323 = vmatpush.bf16.msra.mxu0 %v259
    %324 = vmatpush.bf16.msra.mxu0 %v255
    %325 = vmatpush.bf16.msra.mxu0 %v251
    %326 = vmatpush.bf16.msra.mxu0 %v247
    %327 = vmatpush.bf16.msra.mxu0 %v243
    %328 = vmatpush.bf16.msra.mxu0 %v239
    %329 = vmatpush.bf16.msra.mxu0 %v235
    %330 = vmatpush.bf16.msra.mxu0 %v231
    %331 = vmatmul.bf16.gmra.mxu0 %v126
    %v332 = vpop.f32.mrf.mxu0
    %v333 = vadd.f32 %v103, %v332
    %v334 = vpop.f32.mrf.mxu0
    %v335 = vadd.f32 %v103, %v334
    %336 = vmatmul.bf16.gmra.mxu0 %v127
    %v337 = vpop.f32.mrf.mxu0
    %v338 = vadd.f32 %v103, %v337
    %v339 = vpop.f32.mrf.mxu0
    %v340 = vadd.f32 %v103, %v339
    %341 = vmatmul.bf16.gmra.mxu0 %v128
    %v342 = vpop.f32.mrf.mxu0
    %v343 = vadd.f32 %v103, %v342
    %v344 = vpop.f32.mrf.mxu0
    %v345 = vadd.f32 %v103, %v344
    %346 = vmatmul.bf16.gmra.mxu0 %v129
    %v347 = vpop.f32.mrf.mxu0
    %v348 = vadd.f32 %v103, %v347
    %v349 = vpop.f32.mrf.mxu0
    %v350 = vadd.f32 %v103, %v349
    %351 = vdwg.mxu0
    %352 = vmatpush.bf16.msra.mxu0 %v260
    %353 = vmatpush.bf16.msra.mxu0 %v256
    %354 = vmatpush.bf16.msra.mxu0 %v252
    %355 = vmatpush.bf16.msra.mxu0 %v248
    %356 = vmatpush.bf16.msra.mxu0 %v244
    %357 = vmatpush.bf16.msra.mxu0 %v240
    %358 = vmatpush.bf16.msra.mxu0 %v236
    %359 = vmatpush.bf16.msra.mxu0 %v232
    %360 = vmatmul.bf16.gmra.mxu0 %v126
    %v361 = vpop.f32.mrf.mxu0
    %v362 = vadd.f32 %v104, %v361
    %v363 = vpop.f32.mrf.mxu0
    %v364 = vadd.f32 %v104, %v363
    %365 = vmatmul.bf16.gmra.mxu0 %v127
    %v366 = vpop.f32.mrf.mxu0
    %v367 = vadd.f32 %v104, %v366
    %v368 = vpop.f32.mrf.mxu0
    %v369 = vadd.f32 %v104, %v368
    %370 = vmatmul.bf16.gmra.mxu0 %v128
    %v371 = vpop.f32.mrf.mxu0
    %v372 = vadd.f32 %v104, %v371
    %v373 = vpop.f32.mrf.mxu0
    %v374 = vadd.f32 %v104, %v373
    %375 = vmatmul.bf16.gmra.mxu0 %v129
    %v376 = vpop.f32.mrf.mxu0
    %v377 = vadd.f32 %v104, %v376
    %v378 = vpop.f32.mrf.mxu0
    %v379 = vadd.f32 %v104, %v378
    %380 = vdwg.mxu0
    %381 = vmatpush.bf16.msra.mxu0 %v261
    %382 = vmatpush.bf16.msra.mxu0 %v257
    %383 = vmatpush.bf16.msra.mxu0 %v253
    %384 = vmatpush.bf16.msra.mxu0 %v249
    %385 = vmatpush.bf16.msra.mxu0 %v245
    %386 = vmatpush.bf16.msra.mxu0 %v241
    %387 = vmatpush.bf16.msra.mxu0 %v237
    %388 = vmatpush.bf16.msra.mxu0 %v233
    %389 = vmatmul.bf16.gmra.mxu0 %v126
    %v390 = vpop.f32.mrf.mxu0
    %v391 = vadd.f32 %v105, %v390
    %v392 = vpop.f32.mrf.mxu0
    %v393 = vadd.f32 %v105, %v392
    %394 = vmatmul.bf16.gmra.mxu0 %v127
    %v395 = vpop.f32.mrf.mxu0
    %v396 = vadd.f32 %v105, %v395
    %v397 = vpop.f32.mrf.mxu0
    %v398 = vadd.f32 %v105, %v397
    %399 = vmatmul.bf16.gmra.mxu0 %v128
    %v400 = vpop.f32.mrf.mxu0
    %v401 = vadd.f32 %v105, %v400
    %v402 = vpop.f32.mrf.mxu0
    %v403 = vadd.f32 %v105, %v402
    %404 = vmatmul.bf16.gmra.mxu0 %v129
    %v405 = vpop.f32.mrf.mxu0
    %v406 = vadd.f32 %v105, %v405
    %v407 = vpop.f32.mrf.mxu0
    %v408 = vadd.f32 %v105, %v407
    %409 = vdwg.mxu0
    %410 = vst [vmem:[#allocation8] sm:$0xff] %v304
    %411 = vst [vmem:[#allocation8 + $0x8] sm:$0xff] %v333
    %412 = vst [vmem:[#allocation8 + $0x10] sm:$0xff] %v362
    %413 = vst [vmem:[#allocation8 + $0x18] sm:$0xff] %v391
    %414 = vst [vmem:[#allocation8 + $0x20] sm:$0xff] %v306
    %415 = vst [vmem:[#allocation8 + $0x28] sm:$0xff] %v335
    %416 = vst [vmem:[#allocation8 + $0x30] sm:$0xff] %v364
    %417 = vst [vmem:[#allocation8 + $0x38] sm:$0xff] %v393
    %418 = vst [vmem:[#allocation8 + $0x40] sm:$0xff] %v309
    %419 = vst [vmem:[#allocation8 + $0x48] sm:$0xff] %v338
    %420 = vst [vmem:[#allocation8 + $0x50] sm:$0xff] %v367
    %421 = vst [vmem:[#allocation8 + $0x58] sm:$0xff] %v396
    %422 = vst [vmem:[#allocation8 + $0x60] sm:$0xff] %v311
    %423 = vst [vmem:[#allocation8 + $0x68] sm:$0xff] %v340
    %424 = vst [vmem:[#allocation8 + $0x70] sm:$0xff] %v369
    %425 = vst [vmem:[#allocation8 + $0x78] sm:$0xff] %v398
    %426 = vst [vmem:[#allocation8 + $0x80] sm:$0xff] %v314
    %427 = vst [vmem:[#allocation8 + $0x88] sm:$0xff] %v343
    %428 = vst [vmem:[#allocation8 + $0x90] sm:$0xff] %v372
    %429 = vst [vmem:[#allocation8 + $0x98] sm:$0xff] %v401
    %430 = vst [vmem:[#allocation8 + $0xa0] sm:$0xff] %v316
    %431 = vst [vmem:[#allocation8 + $0xa8] sm:$0xff] %v345
    %432 = vst [vmem:[#allocation8 + $0xb0] sm:$0xff] %v374
    %433 = vst [vmem:[#allocation8 + $0xb8] sm:$0xff] %v403
    %434 = vst [vmem:[#allocation8 + $0xc0] sm:$0xff] %v319
    %435 = vst [vmem:[#allocation8 + $0xc8] sm:$0xff] %v348
    %436 = vst [vmem:[#allocation8 + $0xd0] sm:$0xff] %v377
    %437 = vst [vmem:[#allocation8 + $0xd8] sm:$0xff] %v406
    %438 = vst [vmem:[#allocation8 + $0xe0] sm:$0xff] %v321
    %439 = vst [vmem:[#allocation8 + $0xe8] sm:$0xff] %v350
    %440 = vst [vmem:[#allocation8 + $0xf0] sm:$0xff] %v379
    %441 = vst [vmem:[#allocation8 + $0xf8] sm:$0xff] %v408
    // Predicated region
    $region26: #{tpu_custom_call.1} parent=1 // pred_check
      _
    $region27: #{tpu_custom_call.1} parent=1 // pred_check_branch
      %443 = sbr.rel (0) target = $region29
    $region28: #{tpu_custom_call.1} parent=1 // pred_region
      %445 = vsyncadd [#allocation4], 0
      %s446 = sshll.u32 [#allocation8], 4
      %s447 = int_to_ptr.vmem [resolvable:$true] %s446
      %s448 = sshll.u32 %s3, 4
      %s449 = int_to_ptr.hbm [resolvable:$true] %s448
      %454 = dma.vmem_to_hbm [thread:$0]  %s447, 4096, %s449, [#allocation4], 512, 512, 32
    $region29: #{tpu_custom_call.1} parent=1 // pred_fallthru
      _
    // Predicated region
    $region30: #{tpu_custom_call.1} parent=1 // pred_check
      _
    $region31: #{tpu_custom_call.1} parent=1 // pred_check_branch
      %456 = sbr.rel (0) target = $region33
    $region32: #{tpu_custom_call.1} parent=1 // pred_region
      %458 = dma.done [#allocation4], 4096
    $region33: #{tpu_custom_call.1} parent=1 // pred_fallthru
      _
    %459 = vsyncpa [#allocation3], 1
    %460 = vsyncpa [#allocation6], 1
    %461 = vsyncpa [#allocation4], 1

</llo_original>
